<compile_context>
chip_gen: v5e
topology: v5e:2x2
jax: 0.10.0
libtpu: 0.0.40
codegen_flags: <defaults>
</compile_context>

<pallas_src>
import functools

import jax
import jax.numpy as jnp
from jax.experimental import pallas as pl
from jax.experimental.pallas import tpu as pltpu

LANE = 128


def _round_up(x, m):
    return (x + m - 1) // m * m


def fused_gcn_kernel(*refs, n_layers, batch, nodes, use_mask, use_pad):
    """Single invocation: all batch rows flattened, all layers fused."""
    idx = 0
    x_ref = refs[idx]; idx += 1
    mask_ref = None
    pad_ref = None
    if use_mask:
        mask_ref = refs[idx]; idx += 1
    if use_pad:
        pad_ref = refs[idx]; idx += 1
    wuv_ref, buv_ref, gamma_ref, beta_ref, out_ref = refs[idx:idx + 5]

    dp = wuv_ref.shape[1]                       # padded feature width
    rows = batch * nodes

    h = x_ref[...].astype(jnp.float32)          # (B*N, Dp), f32

    # Hoisted loop invariants (JAX does not CSE broadcast_in_dim).
    if use_mask:
        m_blocks = [mask_ref[b] for b in range(batch)]            # each (N, N) bf16
    if use_pad:
        pad_b = jnp.broadcast_to(pad_ref[...], (rows, dp))        # (B*N, Dp) f32

    # Static unroll over layers: weights stay VMEM-resident, h stays in vregs.
    for l in range(n_layers):
        if use_pad:
            h = h * pad_b
        # Fused [U | V] matmul on flattened rows; bf16 operands, f32 accumulation.
        uv = jnp.dot(h.astype(jnp.bfloat16), wuv_ref[l],
                     preferred_element_type=jnp.float32) + buv_ref[l]
        ux = uv[:, :dp]                          # (B*N, Dp)
        vx = uv[:, dp:]                          # (B*N, Dp)

        # Per-batch aggregation over nodes (block-diagonal structure).
        aggs = []
        for b in range(batch):
            vx_b = vx[b * nodes:(b + 1) * nodes, :]               # (N, Dp), 8-aligned
            if use_mask:
                agg_b = jnp.dot(m_blocks[b], vx_b.astype(jnp.bfloat16),
                                preferred_element_type=jnp.float32)
            else:
                agg_b = jnp.broadcast_to(
                    jnp.sum(vx_b, axis=0, keepdims=True), (nodes, dp))
            aggs.append(agg_b)
        agg = jnp.concatenate(aggs, axis=0) if batch > 1 else aggs[0]

        hc = jnp.maximum(ux + agg, 0.0)          # ReLU; dropout = identity (eval)
        h = (h + hc) * gamma_ref[l] + beta_ref[l]   # skip + folded BatchNorm1d (eval)

    out_ref[...] = h.astype(out_ref.dtype)


def init_params(key, coord_input_dim, feat_dict_size, embed_dim, n_layers):
    """Deterministic synthetic parameters mirroring the PyTorch module's shapes."""
    D = embed_dim * 3
    keys = jax.random.split(key, 2 + 6 * n_layers)
    params = {}
    # nn.Linear(coord_input_dim, embed_dim, bias=False); weight stored as (in, out).
    params["coord_w"] = jax.random.uniform(
        keys[0], (coord_input_dim, embed_dim), jnp.float32,
        -1.0 / coord_input_dim ** 0.5, 1.0 / coord_input_dim ** 0.5)
    # nn.Embedding(feat_dict_size, embed_dim)
    params["embed"] = jax.random.normal(keys[1], (feat_dict_size, embed_dim), jnp.float32)

    stdv = 1.0 / float(D) ** 0.5
    layers = []
    for l in range(n_layers):
        k = keys[2 + 6 * l: 2 + 6 * (l + 1)]
        layers.append(dict(
            u_w=jax.random.uniform(k[0], (D, D), jnp.float32, -stdv, stdv),
            u_b=jax.random.uniform(k[1], (1, D), jnp.float32, -stdv, stdv),
            v_w=jax.random.uniform(k[2], (D, D), jnp.float32, -stdv, stdv),
            v_b=jax.random.uniform(k[3], (1, D), jnp.float32, -stdv, stdv),
            bn_gamma=jax.random.uniform(k[4], (1, D), jnp.float32, -stdv, stdv),
            bn_beta=jax.random.uniform(k[5], (1, D), jnp.float32, -stdv, stdv),
            bn_mean=jnp.zeros((1, D), jnp.float32),   # running stats at init
            bn_var=jnp.ones((1, D), jnp.float32),
        ))
    params["layers"] = layers
    return params


def prepack_params(params, eps=1e-5):
    """ONE-TIME packing (out of the forward hot path):
    stack per-layer weights, zero-pad to lane width, fold BatchNorm, cast MXU
    operands (the fused [U|V] weight stack) to bf16."""
    layers = params["layers"]
    D = layers[0]["u_w"].shape[0]
    Dp = _round_up(D, LANE)

    u_w = jnp.stack([l["u_w"] for l in layers])        # (L, D, D)
    v_w = jnp.stack([l["v_w"] for l in layers])
    u_b = jnp.stack([l["u_b"] for l in layers])        # (L, 1, D)
    v_b = jnp.stack([l["v_b"] for l in layers])
    gamma = jnp.stack([l["bn_gamma"] for l in layers])
    beta = jnp.stack([l["bn_beta"] for l in layers])
    mean = jnp.stack([l["bn_mean"] for l in layers])
    var = jnp.stack([l["bn_var"] for l in layers])

    inv_std = 1.0 / jnp.sqrt(var + eps)                # folded BN (eval mode)
    g_eff = gamma * inv_std
    b_eff = beta - mean * g_eff

    pad_w = ((0, 0), (0, Dp - D), (0, Dp - D))
    pad_v = ((0, 0), (0, 0), (0, Dp - D))
    wuv = jnp.concatenate([jnp.pad(u_w, pad_w), jnp.pad(v_w, pad_w)],
                          axis=-1).astype(jnp.bfloat16)   # (L, Dp, 2*Dp) bf16
    buv = jnp.concatenate([jnp.pad(u_b, pad_v), jnp.pad(v_b, pad_v)],
                          axis=-1).astype(jnp.float32)    # (L, 1, 2*Dp) f32
    gam = jnp.pad(g_eff, pad_v).astype(jnp.float32)       # (L, 1, Dp) f32
    bet = jnp.pad(b_eff, pad_v).astype(jnp.float32)

    return {"coord_w": params["coord_w"], "embed": params["embed"],
            "wuv": wuv, "buv": buv, "gamma": gam, "beta": bet}


def graph_conv_net_encoder(packed, coord, flag, pos,
                           attention_mask=None, padding_mask=None):
    B, N, _ = coord.shape
    # Glue in plain JAX: tiny coord linear + embedding gathers + concat.
    ce = coord @ packed["coord_w"]                       # (B, N, embed_dim)
    fe = packed["embed"][flag]                           # (B, N, embed_dim)
    pe = packed["embed"][pos]                            # (B, N, embed_dim)
    h = jnp.concatenate([ce, fe, pe], axis=2).astype(jnp.float32)   # (B, N, D)

    D = h.shape[-1]
    L, Dp, _ = packed["wuv"].shape
    BN = B * N

    # Lane-pad and flatten rows: (B*N, Dp) so one matmul covers the whole batch.
    h_flat = jnp.pad(h, ((0, 0), (0, 0), (0, Dp - D))).reshape(BN, Dp)

    use_mask = attention_mask is not None
    use_pad = padding_mask is not None

    args = [h_flat]
    if use_mask:
        args.append(attention_mask.reshape(B, N, N).astype(jnp.bfloat16))
    if use_pad:
        args.append(padding_mask.reshape(BN, 1).astype(jnp.float32))
    args += [packed["wuv"], packed["buv"], packed["gamma"], packed["beta"]]

    # Single invocation (no grid) -> whole arrays resident in VMEM, no redundant
    # pipeline double-buffering of the constant weight stack.
    in_specs = [pl.BlockSpec(memory_space=pltpu.MemorySpace.VMEM)] * len(args)
    out_specs = pl.BlockSpec(memory_space=pltpu.MemorySpace.VMEM)

    mm_flops = 2 * BN * Dp * (2 * Dp) * L
    agg_flops = (2 * B * N * N * Dp * L) if use_mask else (B * N * Dp * L)
    bytes_accessed = sum(int(a.size) * a.dtype.itemsize for a in args) + BN * Dp * 4

    kernel = functools.partial(fused_gcn_kernel, n_layers=L, batch=B, nodes=N,
                               use_mask=use_mask, use_pad=use_pad)
    out_flat = pl.pallas_call(
        kernel,
        out_shape=jax.ShapeDtypeStruct((BN, Dp), jnp.float32),
        in_specs=in_specs,
        out_specs=out_specs,
        compiler_params=pltpu.CompilerParams(vmem_limit_bytes=32 * 1024 * 1024),
        cost_estimate=pl.CostEstimate(flops=int(mm_flops + agg_flops),
                                      transcendentals=0,
                                      bytes_accessed=int(bytes_accessed)),
    )(*args)

    return out_flat.reshape(B, N, Dp)[:, :, :D]


if __name__ == "__main__":
    B, N = 2, 8
    coord_input_dim = 2
    feat_dict_size = 11
    embed_dim = 32          # layer width D = 3 * embed_dim = 96 (padded to 128 in-kernel)
    n_layers = 3

    key = jax.random.PRNGKey(0)
    kp, kc, kf, kpos, km, kpad = jax.random.split(key, 6)

    params = init_params(kp, coord_input_dim, feat_dict_size, embed_dim, n_layers)
    packed = prepack_params(params)      # one-time prepack, out of the hot path

    coord = jax.random.normal(kc, (B, N, coord_input_dim), jnp.float32)
    flag = jax.random.randint(kf, (B, N), 0, feat_dict_size)
    pos = jax.random.randint(kpos, (B, N), 0, feat_dict_size)
    attention_mask = (jax.random.uniform(km, (B, N, N)) > 0.3).astype(jnp.float32)
    padding_mask = (jax.random.uniform(kpad, (B, N)) > 0.2).astype(jnp.float32)

    forward = jax.jit(graph_conv_net_encoder)   # glue ops fuse/overlap with the kernel

    # Masked + padded path.
    out = jax.block_until_ready(
        forward(packed, coord, flag, pos, attention_mask, padding_mask))
    assert out.shape == (B, N, 3 * embed_dim)
    assert bool(jnp.all(jnp.isfinite(out)))

    # Mask-less (broadcast node-sum) path.
    out2 = jax.block_until_ready(forward(packed, coord, flag, pos, None, None))
    assert out2.shape == (B, N, 3 * embed_dim)
    assert bool(jnp.all(jnp.isfinite(out2)))

    print("KERNEL_OK")
</pallas_src>

<mosaic_0001>
module attributes {stable_mosaic.version = 11 : i64} {
  func.func @fused_gcn_kernel(%arg0: memref<16x128xf32, #tpu.memory_space<vmem>>, %arg1: memref<2x8x8xbf16, #tpu.memory_space<vmem>>, %arg2: memref<16x1xf32, #tpu.memory_space<vmem>>, %arg3: memref<3x128x256xbf16, #tpu.memory_space<vmem>>, %arg4: memref<3x1x256xf32, #tpu.memory_space<vmem>>, %arg5: memref<3x1x128xf32, #tpu.memory_space<vmem>>, %arg6: memref<3x1x128xf32, #tpu.memory_space<vmem>>, %arg7: memref<16x128xf32, #tpu.memory_space<vmem>>) attributes {dimension_semantics = [], scalar_prefetch = 0 : i64, scratch_operands = 0 : i64, tpu.core_type = #tpu.core_type<tc>} {
    %c0 = arith.constant 0 : index
    %c0_0 = arith.constant 0 : index
    %0 = vector.load %arg0[%c0, %c0_0] : memref<16x128xf32, #tpu.memory_space<vmem>>, vector<16x128xf32>
    %c0_1 = arith.constant 0 : index
    %c0_2 = arith.constant 0 : index
    %c0_3 = arith.constant 0 : index
    %1 = vector.load %arg1[%c0_1, %c0_2, %c0_3] : memref<2x8x8xbf16, #tpu.memory_space<vmem>>, vector<1x8x8xbf16>
    %2 = vector.shape_cast %1 : vector<1x8x8xbf16> to vector<8x8xbf16>
    %c1 = arith.constant 1 : index
    %c0_4 = arith.constant 0 : index
    %c0_5 = arith.constant 0 : index
    %3 = vector.load %arg1[%c1, %c0_4, %c0_5] : memref<2x8x8xbf16, #tpu.memory_space<vmem>>, vector<1x8x8xbf16>
    %4 = vector.shape_cast %3 : vector<1x8x8xbf16> to vector<8x8xbf16>
    %c0_6 = arith.constant 0 : index
    %c0_7 = arith.constant 0 : index
    %5 = vector.load %arg2[%c0_6, %c0_7] : memref<16x1xf32, #tpu.memory_space<vmem>>, vector<16x1xf32>
    %6 = vector.shape_cast %5 : vector<16x1xf32> to vector<16x1xf32>
    %7 = vector.broadcast %6 : vector<16x1xf32> to vector<16x128xf32>
    %8 = arith.mulf %0, %7 : vector<16x128xf32>
    %9 = arith.truncf %8 : vector<16x128xf32> to vector<16x128xbf16>
    %c0_8 = arith.constant 0 : index
    %c0_9 = arith.constant 0 : index
    %c0_10 = arith.constant 0 : index
    %10 = vector.load %arg3[%c0_8, %c0_9, %c0_10] : memref<3x128x256xbf16, #tpu.memory_space<vmem>>, vector<1x128x256xbf16>
    %11 = vector.shape_cast %10 : vector<1x128x256xbf16> to vector<128x256xbf16>
    %cst = arith.constant dense<0.000000e+00> : vector<16x256xf32>
    %12 = tpu.matmul %9, %11, %cst {dimension_numbers = #tpu.dot_dimension_numbers<[1], [0], [0], [1], [0, 0, 1, 1], [], []>} : vector<16x128xbf16>, vector<128x256xbf16>, vector<16x256xf32> -> vector<16x256xf32>
    %c0_11 = arith.constant 0 : index
    %c0_12 = arith.constant 0 : index
    %c0_13 = arith.constant 0 : index
    %13 = vector.load %arg4[%c0_11, %c0_12, %c0_13] : memref<3x1x256xf32, #tpu.memory_space<vmem>>, vector<1x1x256xf32>
    %14 = vector.shape_cast %13 : vector<1x1x256xf32> to vector<1x256xf32>
    %15 = vector.broadcast %14 : vector<1x256xf32> to vector<16x256xf32>
    %16 = arith.addf %12, %15 : vector<16x256xf32>
    %17 = vector.extract_strided_slice %16 {offsets = [0, 0], sizes = [16, 128], strides = [1, 1]} : vector<16x256xf32> to vector<16x128xf32>
    %18 = vector.extract_strided_slice %16 {offsets = [0, 128], sizes = [16, 128], strides = [1, 1]} : vector<16x256xf32> to vector<16x128xf32>
    %19 = vector.extract_strided_slice %18 {offsets = [0, 0], sizes = [8, 128], strides = [1, 1]} : vector<16x128xf32> to vector<8x128xf32>
    %20 = arith.truncf %19 : vector<8x128xf32> to vector<8x128xbf16>
    %cst_14 = arith.constant dense<0.000000e+00> : vector<8x128xf32>
    %21 = tpu.matmul %2, %20, %cst_14 {dimension_numbers = #tpu.dot_dimension_numbers<[1], [0], [0], [1], [0, 0, 1, 1], [], []>} : vector<8x8xbf16>, vector<8x128xbf16>, vector<8x128xf32> -> vector<8x128xf32>
    %22 = vector.extract_strided_slice %18 {offsets = [8, 0], sizes = [8, 128], strides = [1, 1]} : vector<16x128xf32> to vector<8x128xf32>
    %23 = arith.truncf %22 : vector<8x128xf32> to vector<8x128xbf16>
    %cst_15 = arith.constant dense<0.000000e+00> : vector<8x128xf32>
    %24 = tpu.matmul %4, %23, %cst_15 {dimension_numbers = #tpu.dot_dimension_numbers<[1], [0], [0], [1], [0, 0, 1, 1], [], []>} : vector<8x8xbf16>, vector<8x128xbf16>, vector<8x128xf32> -> vector<8x128xf32>
    %25 = tpu.concatenate %21, %24 in 0 : vector<8x128xf32>, vector<8x128xf32> -> vector<16x128xf32>
    %26 = arith.addf %17, %25 : vector<16x128xf32>
    %cst_16 = arith.constant 0.000000e+00 : f32
    %27 = vector.broadcast %cst_16 : f32 to vector<16x128xf32>
    %28 = arith.maximumf %26, %27 : vector<16x128xf32>
    %29 = arith.addf %8, %28 : vector<16x128xf32>
    %c0_17 = arith.constant 0 : index
    %c0_18 = arith.constant 0 : index
    %c0_19 = arith.constant 0 : index
    %30 = vector.load %arg5[%c0_17, %c0_18, %c0_19] : memref<3x1x128xf32, #tpu.memory_space<vmem>>, vector<1x1x128xf32>
    %31 = vector.shape_cast %30 : vector<1x1x128xf32> to vector<1x128xf32>
    %32 = vector.broadcast %31 : vector<1x128xf32> to vector<16x128xf32>
    %33 = arith.mulf %29, %32 : vector<16x128xf32>
    %c0_20 = arith.constant 0 : index
    %c0_21 = arith.constant 0 : index
    %c0_22 = arith.constant 0 : index
    %34 = vector.load %arg6[%c0_20, %c0_21, %c0_22] : memref<3x1x128xf32, #tpu.memory_space<vmem>>, vector<1x1x128xf32>
    %35 = vector.shape_cast %34 : vector<1x1x128xf32> to vector<1x128xf32>
    %36 = vector.broadcast %35 : vector<1x128xf32> to vector<16x128xf32>
    %37 = arith.addf %33, %36 : vector<16x128xf32>
    %38 = arith.mulf %37, %7 : vector<16x128xf32>
    %39 = arith.truncf %38 : vector<16x128xf32> to vector<16x128xbf16>
    %c1_23 = arith.constant 1 : index
    %c0_24 = arith.constant 0 : index
    %c0_25 = arith.constant 0 : index
    %40 = vector.load %arg3[%c1_23, %c0_24, %c0_25] : memref<3x128x256xbf16, #tpu.memory_space<vmem>>, vector<1x128x256xbf16>
    %41 = vector.shape_cast %40 : vector<1x128x256xbf16> to vector<128x256xbf16>
    %cst_26 = arith.constant dense<0.000000e+00> : vector<16x256xf32>
    %42 = tpu.matmul %39, %41, %cst_26 {dimension_numbers = #tpu.dot_dimension_numbers<[1], [0], [0], [1], [0, 0, 1, 1], [], []>} : vector<16x128xbf16>, vector<128x256xbf16>, vector<16x256xf32> -> vector<16x256xf32>
    %c1_27 = arith.constant 1 : index
    %c0_28 = arith.constant 0 : index
    %c0_29 = arith.constant 0 : index
    %43 = vector.load %arg4[%c1_27, %c0_28, %c0_29] : memref<3x1x256xf32, #tpu.memory_space<vmem>>, vector<1x1x256xf32>
    %44 = vector.shape_cast %43 : vector<1x1x256xf32> to vector<1x256xf32>
    %45 = vector.broadcast %44 : vector<1x256xf32> to vector<16x256xf32>
    %46 = arith.addf %42, %45 : vector<16x256xf32>
    %47 = vector.extract_strided_slice %46 {offsets = [0, 0], sizes = [16, 128], strides = [1, 1]} : vector<16x256xf32> to vector<16x128xf32>
    %48 = vector.extract_strided_slice %46 {offsets = [0, 128], sizes = [16, 128], strides = [1, 1]} : vector<16x256xf32> to vector<16x128xf32>
    %49 = vector.extract_strided_slice %48 {offsets = [0, 0], sizes = [8, 128], strides = [1, 1]} : vector<16x128xf32> to vector<8x128xf32>
    %50 = arith.truncf %49 : vector<8x128xf32> to vector<8x128xbf16>
    %cst_30 = arith.constant dense<0.000000e+00> : vector<8x128xf32>
    %51 = tpu.matmul %2, %50, %cst_30 {dimension_numbers = #tpu.dot_dimension_numbers<[1], [0], [0], [1], [0, 0, 1, 1], [], []>} : vector<8x8xbf16>, vector<8x128xbf16>, vector<8x128xf32> -> vector<8x128xf32>
    %52 = vector.extract_strided_slice %48 {offsets = [8, 0], sizes = [8, 128], strides = [1, 1]} : vector<16x128xf32> to vector<8x128xf32>
    %53 = arith.truncf %52 : vector<8x128xf32> to vector<8x128xbf16>
    %cst_31 = arith.constant dense<0.000000e+00> : vector<8x128xf32>
    %54 = tpu.matmul %4, %53, %cst_31 {dimension_numbers = #tpu.dot_dimension_numbers<[1], [0], [0], [1], [0, 0, 1, 1], [], []>} : vector<8x8xbf16>, vector<8x128xbf16>, vector<8x128xf32> -> vector<8x128xf32>
    %55 = tpu.concatenate %51, %54 in 0 : vector<8x128xf32>, vector<8x128xf32> -> vector<16x128xf32>
    %56 = arith.addf %47, %55 : vector<16x128xf32>
    %cst_32 = arith.constant 0.000000e+00 : f32
    %57 = vector.broadcast %cst_32 : f32 to vector<16x128xf32>
    %58 = arith.maximumf %56, %57 : vector<16x128xf32>
    %59 = arith.addf %38, %58 : vector<16x128xf32>
    %c1_33 = arith.constant 1 : index
    %c0_34 = arith.constant 0 : index
    %c0_35 = arith.constant 0 : index
    %60 = vector.load %arg5[%c1_33, %c0_34, %c0_35] : memref<3x1x128xf32, #tpu.memory_space<vmem>>, vector<1x1x128xf32>
    %61 = vector.shape_cast %60 : vector<1x1x128xf32> to vector<1x128xf32>
    %62 = vector.broadcast %61 : vector<1x128xf32> to vector<16x128xf32>
    %63 = arith.mulf %59, %62 : vector<16x128xf32>
    %c1_36 = arith.constant 1 : index
    %c0_37 = arith.constant 0 : index
    %c0_38 = arith.constant 0 : index
    %64 = vector.load %arg6[%c1_36, %c0_37, %c0_38] : memref<3x1x128xf32, #tpu.memory_space<vmem>>, vector<1x1x128xf32>
    %65 = vector.shape_cast %64 : vector<1x1x128xf32> to vector<1x128xf32>
    %66 = vector.broadcast %65 : vector<1x128xf32> to vector<16x128xf32>
    %67 = arith.addf %63, %66 : vector<16x128xf32>
    %68 = arith.mulf %67, %7 : vector<16x128xf32>
    %69 = arith.truncf %68 : vector<16x128xf32> to vector<16x128xbf16>
    %c2 = arith.constant 2 : index
    %c0_39 = arith.constant 0 : index
    %c0_40 = arith.constant 0 : index
    %70 = vector.load %arg3[%c2, %c0_39, %c0_40] : memref<3x128x256xbf16, #tpu.memory_space<vmem>>, vector<1x128x256xbf16>
    %71 = vector.shape_cast %70 : vector<1x128x256xbf16> to vector<128x256xbf16>
    %cst_41 = arith.constant dense<0.000000e+00> : vector<16x256xf32>
    %72 = tpu.matmul %69, %71, %cst_41 {dimension_numbers = #tpu.dot_dimension_numbers<[1], [0], [0], [1], [0, 0, 1, 1], [], []>} : vector<16x128xbf16>, vector<128x256xbf16>, vector<16x256xf32> -> vector<16x256xf32>
    %c2_42 = arith.constant 2 : index
    %c0_43 = arith.constant 0 : index
    %c0_44 = arith.constant 0 : index
    %73 = vector.load %arg4[%c2_42, %c0_43, %c0_44] : memref<3x1x256xf32, #tpu.memory_space<vmem>>, vector<1x1x256xf32>
    %74 = vector.shape_cast %73 : vector<1x1x256xf32> to vector<1x256xf32>
    %75 = vector.broadcast %74 : vector<1x256xf32> to vector<16x256xf32>
    %76 = arith.addf %72, %75 : vector<16x256xf32>
    %77 = vector.extract_strided_slice %76 {offsets = [0, 0], sizes = [16, 128], strides = [1, 1]} : vector<16x256xf32> to vector<16x128xf32>
    %78 = vector.extract_strided_slice %76 {offsets = [0, 128], sizes = [16, 128], strides = [1, 1]} : vector<16x256xf32> to vector<16x128xf32>
    %79 = vector.extract_strided_slice %78 {offsets = [0, 0], sizes = [8, 128], strides = [1, 1]} : vector<16x128xf32> to vector<8x128xf32>
    %80 = arith.truncf %79 : vector<8x128xf32> to vector<8x128xbf16>
    %cst_45 = arith.constant dense<0.000000e+00> : vector<8x128xf32>
    %81 = tpu.matmul %2, %80, %cst_45 {dimension_numbers = #tpu.dot_dimension_numbers<[1], [0], [0], [1], [0, 0, 1, 1], [], []>} : vector<8x8xbf16>, vector<8x128xbf16>, vector<8x128xf32> -> vector<8x128xf32>
    %82 = vector.extract_strided_slice %78 {offsets = [8, 0], sizes = [8, 128], strides = [1, 1]} : vector<16x128xf32> to vector<8x128xf32>
    %83 = arith.truncf %82 : vector<8x128xf32> to vector<8x128xbf16>
    %cst_46 = arith.constant dense<0.000000e+00> : vector<8x128xf32>
    %84 = tpu.matmul %4, %83, %cst_46 {dimension_numbers = #tpu.dot_dimension_numbers<[1], [0], [0], [1], [0, 0, 1, 1], [], []>} : vector<8x8xbf16>, vector<8x128xbf16>, vector<8x128xf32> -> vector<8x128xf32>
    %85 = tpu.concatenate %81, %84 in 0 : vector<8x128xf32>, vector<8x128xf32> -> vector<16x128xf32>
    %86 = arith.addf %77, %85 : vector<16x128xf32>
    %cst_47 = arith.constant 0.000000e+00 : f32
    %87 = vector.broadcast %cst_47 : f32 to vector<16x128xf32>
    %88 = arith.maximumf %86, %87 : vector<16x128xf32>
    %89 = arith.addf %68, %88 : vector<16x128xf32>
    %c2_48 = arith.constant 2 : index
    %c0_49 = arith.constant 0 : index
    %c0_50 = arith.constant 0 : index
    %90 = vector.load %arg5[%c2_48, %c0_49, %c0_50] : memref<3x1x128xf32, #tpu.memory_space<vmem>>, vector<1x1x128xf32>
    %91 = vector.shape_cast %90 : vector<1x1x128xf32> to vector<1x128xf32>
    %92 = vector.broadcast %91 : vector<1x128xf32> to vector<16x128xf32>
    %93 = arith.mulf %89, %92 : vector<16x128xf32>
    %c2_51 = arith.constant 2 : index
    %c0_52 = arith.constant 0 : index
    %c0_53 = arith.constant 0 : index
    %94 = vector.load %arg6[%c2_51, %c0_52, %c0_53] : memref<3x1x128xf32, #tpu.memory_space<vmem>>, vector<1x1x128xf32>
    %95 = vector.shape_cast %94 : vector<1x1x128xf32> to vector<1x128xf32>
    %96 = vector.broadcast %95 : vector<1x128xf32> to vector<16x128xf32>
    %97 = arith.addf %93, %96 : vector<16x128xf32>
    %c0_54 = arith.constant 0 : index
    %c0_55 = arith.constant 0 : index
    %98 = vector.load %arg7[%c0_54, %c0_55] : memref<16x128xf32, #tpu.memory_space<vmem>>, vector<16x128xf32>
    tpu.vector_store %arg7[%c0_54, %c0_55], %97 {strides = array<i32>} : memref<16x128xf32, #tpu.memory_space<vmem>>, vector<16x128xf32>,
    return
  }
}

</mosaic_0001>

<llo_original>
// kernel: graph_conv_net_encoder.1
$region0: #{graph_conv_net_encoder.1}
  #allocation0 [shape = 'u32[]', space=smem, size = 0x4, offset = 0x4, fixed_abs, tag = 'smem constant byte address 0x4 - core index']
  #allocation1 [shape = 'u32[72,128]{1,0:T(1,128)}', space=vmem, size = 0x9000, scoped, tag = 'internal scratch']
  %s0 = inlined_call_operand.vmem [shape: f32[16,128], index: 0, kind: input, shape index: {}]
  %s1 = inlined_call_operand.vmem [shape: bf16[2,8,8], index: 1, kind: input, shape index: {}]
  %s2 = inlined_call_operand.vmem [shape: f32[16,1], index: 2, kind: input, shape index: {}]
  %s3 = inlined_call_operand.vmem [shape: bf16[3,128,256], index: 3, kind: input, shape index: {}]
  %s4 = inlined_call_operand.vmem [shape: f32[3,1,256], index: 4, kind: input, shape index: {}]
  %s5 = inlined_call_operand.vmem [shape: f32[3,1,128], index: 5, kind: input, shape index: {}]
  %s6 = inlined_call_operand.vmem [shape: f32[3,1,128], index: 6, kind: input, shape index: {}]
  %s7 = inlined_call_operand.hbm [shape: f32[16,128], index: 7, kind: output, shape index: {}]
  %s8 = sld [smem:[#allocation0]]
  $region38: #{graph_conv_net_encoder.1} parent=0
    _
  %s10 = ssub.s32 1, %s8
  %s11 = scalar_select 0, %s10, %s8
  $region1: #{graph_conv_net_encoder.1} parent=0
    #allocation2 [shape = 'u8[8192]{0}', space=vmem, size = 0x2000, scoped, tag = 'output window, operand 0, single buffered']
    #allocation3 [shape = 's32[1]{0}', space=sflag, size = 0x4, scoped, tag = 'scoped memory for graph_conv_net_encoder.1']
    %12 = vsyncpa [#allocation3], 0
    // Predicated region
    $region2: #{graph_conv_net_encoder.1} parent=1 // pred_check
      _
    $region3: #{graph_conv_net_encoder.1} parent=1 // pred_check_branch
      %14 = sbr.rel (0) target = $region5
    $region4: #{graph_conv_net_encoder.1} parent=1 // pred_region
      _
    $region5: #{graph_conv_net_encoder.1} parent=1 // pred_fallthru
      _
    // Predicated region
    $region6: #{graph_conv_net_encoder.1} parent=1 // pred_check
      _
    $region7: #{graph_conv_net_encoder.1} parent=1 // pred_check_branch
      %16 = sbr.rel (0) target = $region9
    $region8: #{graph_conv_net_encoder.1} parent=1 // pred_region
      _
    $region9: #{graph_conv_net_encoder.1} parent=1 // pred_fallthru
      _
    // Predicated region
    $region10: #{graph_conv_net_encoder.1} parent=1 // pred_check
      _
    $region11: #{graph_conv_net_encoder.1} parent=1 // pred_check_branch
      %18 = sbr.rel (0) target = $region13
    $region12: #{graph_conv_net_encoder.1} parent=1 // pred_region
      _
    $region13: #{graph_conv_net_encoder.1} parent=1 // pred_fallthru
      _
    // Predicated region
    $region14: #{graph_conv_net_encoder.1} parent=1 // pred_check
      _
    $region15: #{graph_conv_net_encoder.1} parent=1 // pred_check_branch
      %20 = sbr.rel (0) target = $region17
    $region16: #{graph_conv_net_encoder.1} parent=1 // pred_region
      _
    $region17: #{graph_conv_net_encoder.1} parent=1 // pred_fallthru
      _
    // Predicated region
    $region18: #{graph_conv_net_encoder.1} parent=1 // pred_check
      _
    $region19: #{graph_conv_net_encoder.1} parent=1 // pred_check_branch
      %22 = sbr.rel (0) target = $region21
    $region20: #{graph_conv_net_encoder.1} parent=1 // pred_region
      _
    $region21: #{graph_conv_net_encoder.1} parent=1 // pred_fallthru
      _
    // Predicated region
    $region22: #{graph_conv_net_encoder.1} parent=1 // pred_check
      _
    $region23: #{graph_conv_net_encoder.1} parent=1 // pred_check_branch
      %24 = sbr.rel (0) target = $region25
    $region24: #{graph_conv_net_encoder.1} parent=1 // pred_region
      _
    $region25: #{graph_conv_net_encoder.1} parent=1 // pred_fallthru
      _
    // Predicated region
    $region26: #{graph_conv_net_encoder.1} parent=1 // pred_check
      _
    $region27: #{graph_conv_net_encoder.1} parent=1 // pred_check_branch
      %26 = sbr.rel (0) target = $region29
    $region28: #{graph_conv_net_encoder.1} parent=1 // pred_region
      _
    $region29: #{graph_conv_net_encoder.1} parent=1 // pred_fallthru
      _
    %v28 = vld [vmem:[%s0] sm:$0xff]
    %v29 = vld [vmem:[%s0 + $0x8] sm:$0xff]
    %v30 = vld [vmem:[%s1] sm:$0xf]
    %s31 = scalar_lea.vmem %s1, 4
    %v32 = vld [vmem:[%s31] sm:$0xf]
    %v33 = vld [vmem:[%s2] sm:$0xff]
    %v34 = vld [vmem:[%s2 + $0x8] sm:$0xff]
    %36 = vset.pattern.permute.xlu0 0
    %37 = vperm.xlu0 %36, %v33
    %v38 = vpop.permute.xlu0 %37
    %41 = vset.pattern.permute.xlu0 0
    %42 = vperm.xlu0 %41, %v34
    %v43 = vpop.permute.xlu0 %42
    %v45 = vmul.f32 %v28, %v38
    %v46 = vmul.f32 %v29, %v43
    %v47 = vpack.c.bf16 %v46, %v45
    %v48 = vld [vmem:[%s3] sm:$0xff]
    %v49 = vld [vmem:[%s3 + $0x8] sm:$0xff]
    %v50 = vld [vmem:[%s3 + $0x10] sm:$0xff]
    %v51 = vld [vmem:[%s3 + $0x18] sm:$0xff]
    %v52 = vld [vmem:[%s3 + $0x20] sm:$0xff]
    %v53 = vld [vmem:[%s3 + $0x28] sm:$0xff]
    %v54 = vld [vmem:[%s3 + $0x30] sm:$0xff]
    %v55 = vld [vmem:[%s3 + $0x38] sm:$0xff]
    %v56 = vld [vmem:[%s3 + $0x40] sm:$0xff]
    %v57 = vld [vmem:[%s3 + $0x48] sm:$0xff]
    %v58 = vld [vmem:[%s3 + $0x50] sm:$0xff]
    %v59 = vld [vmem:[%s3 + $0x58] sm:$0xff]
    %v60 = vld [vmem:[%s3 + $0x60] sm:$0xff]
    %v61 = vld [vmem:[%s3 + $0x68] sm:$0xff]
    %v62 = vld [vmem:[%s3 + $0x70] sm:$0xff]
    %v63 = vld [vmem:[%s3 + $0x78] sm:$0xff]
    %v64 = vld [vmem:[%s4] sm:$0x3]
    %v66 = vperm.slane %v64, 0
    %v67 = vperm.slane %v64, 1
    %v86 = vunpack.c.l.b16 %v48
    %v87 = vunpack.c.h.b16 %v48
    %v88 = vunpack.c.l.b16 %v49
    %v89 = vunpack.c.h.b16 %v49
    %v90 = vunpack.c.l.b16 %v50
    %v91 = vunpack.c.h.b16 %v50
    %v92 = vunpack.c.l.b16 %v51
    %v93 = vunpack.c.h.b16 %v51
    %v94 = vunpack.c.l.b16 %v52
    %v95 = vunpack.c.h.b16 %v52
    %v96 = vunpack.c.l.b16 %v53
    %v97 = vunpack.c.h.b16 %v53
    %v98 = vunpack.c.l.b16 %v54
    %v99 = vunpack.c.h.b16 %v54
    %v100 = vunpack.c.l.b16 %v55
    %v101 = vunpack.c.h.b16 %v55
    %v102 = vunpack.c.l.b16 %v56
    %v103 = vunpack.c.h.b16 %v56
    %v104 = vunpack.c.l.b16 %v57
    %v105 = vunpack.c.h.b16 %v57
    %v106 = vunpack.c.l.b16 %v58
    %v107 = vunpack.c.h.b16 %v58
    %v108 = vunpack.c.l.b16 %v59
    %v109 = vunpack.c.h.b16 %v59
    %v110 = vunpack.c.l.b16 %v60
    %v111 = vunpack.c.h.b16 %v60
    %v112 = vunpack.c.l.b16 %v61
    %v113 = vunpack.c.h.b16 %v61
    %v114 = vunpack.c.l.b16 %v62
    %v115 = vunpack.c.h.b16 %v62
    %v116 = vunpack.c.l.b16 %v63
    %v117 = vunpack.c.h.b16 %v63
    %v118 = vpack.c.b16 %v88, %v86
    %v119 = vpack.c.b16 %v89, %v87
    %v120 = vpack.c.b16 %v92, %v90
    %v121 = vpack.c.b16 %v93, %v91
    %v122 = vpack.c.b16 %v96, %v94
    %v123 = vpack.c.b16 %v97, %v95
    %v124 = vpack.c.b16 %v100, %v98
    %v125 = vpack.c.b16 %v101, %v99
    %v126 = vpack.c.b16 %v104, %v102
    %v127 = vpack.c.b16 %v105, %v103
    %v128 = vpack.c.b16 %v108, %v106
    %v129 = vpack.c.b16 %v109, %v107
    %v130 = vpack.c.b16 %v112, %v110
    %v131 = vpack.c.b16 %v113, %v111
    %v132 = vpack.c.b16 %v116, %v114
    %v133 = vpack.c.b16 %v117, %v115
    %150 = vmatpush.bf16.msra.mxu0 %v132
    %151 = vmatpush.bf16.msra.mxu0 %v130
    %152 = vmatpush.bf16.msra.mxu0 %v128
    %153 = vmatpush.bf16.msra.mxu0 %v126
    %154 = vmatpush.bf16.msra.mxu0 %v124
    %155 = vmatpush.bf16.msra.mxu0 %v122
    %156 = vmatpush.bf16.msra.mxu0 %v120
    %157 = vmatpush.bf16.msra.mxu0 %v118
    %158 = vmatmul.bf16.gmra.mxu0 %v47
    %v159 = vpop.f32.mrf.mxu0
    %v160 = vadd.f32 %v66, %v159
    %v161 = vpop.f32.mrf.mxu0
    %v162 = vadd.f32 %v66, %v161
    %163 = vdwg.mxu0
    %164 = vmatpush.bf16.msra.mxu0 %v133
    %165 = vmatpush.bf16.msra.mxu0 %v131
    %166 = vmatpush.bf16.msra.mxu0 %v129
    %167 = vmatpush.bf16.msra.mxu0 %v127
    %168 = vmatpush.bf16.msra.mxu0 %v125
    %169 = vmatpush.bf16.msra.mxu0 %v123
    %170 = vmatpush.bf16.msra.mxu0 %v121
    %171 = vmatpush.bf16.msra.mxu0 %v119
    %172 = vmatmul.bf16.gmra.mxu0 %v47
    %v173 = vpop.f32.mrf.mxu0
    %v174 = vadd.f32 %v67, %v173
    %v175 = vpop.f32.mrf.mxu0
    %v176 = vadd.f32 %v67, %v175
    %177 = vdwg.mxu0
    %v178 = vpack.c.bf16 %v174, %v174
    %vm179 = vcmask 64512
    %v181 = vsel %vm179, %v30, 0
    %vm183 = vcmask 1043456
    %v185 = vsel %vm183, %v178, 0
    %187 = vmatpush.bf16.msra.mxu0 0
    %188 = vmatpush.bf16.msra.mxu0 0
    %189 = vmatpush.bf16.msra.mxu0 0
    %190 = vmatpush.bf16.msra.mxu0 0
    %191 = vmatpush.bf16.msra.mxu0 0
    %192 = vmatpush.bf16.msra.mxu0 0
    %193 = vmatpush.bf16.msra.mxu0 0
    %194 = vmatpush.bf16.msra.mxu0 %v185
    %195 = vmatmul.bf16.gmra.mxu0 %v181
    %v196 = vpop.f32.mrf.mxu0
    %v197 = vadd.f32 0.0, %v196
    %v198 = vpop.f32.mrf.mxu0
    %199 = vdwg.mxu0
    %v200 = vpack.c.bf16 %v176, %v176
    %v202 = vsel %vm179, %v32, 0
    %v205 = vsel %vm183, %v200, 0
    %207 = vmatpush.bf16.msra.mxu0 0
    %208 = vmatpush.bf16.msra.mxu0 0
    %209 = vmatpush.bf16.msra.mxu0 0
    %210 = vmatpush.bf16.msra.mxu0 0
    %211 = vmatpush.bf16.msra.mxu0 0
    %212 = vmatpush.bf16.msra.mxu0 0
    %213 = vmatpush.bf16.msra.mxu0 0
    %214 = vmatpush.bf16.msra.mxu0 %v205
    %215 = vmatmul.bf16.gmra.mxu0 %v202
    %v216 = vpop.f32.mrf.mxu0
    %v217 = vadd.f32 0.0, %v216
    %v218 = vpop.f32.mrf.mxu0
    %219 = vdwg.mxu0
    %v220 = vadd.f32 %v160, %v197
    %v221 = vadd.f32 %v162, %v217
    %v222 = vmax.f32 %v220, 0.0
    %v223 = vmax.f32 %v221, 0.0
    %v224 = vadd.f32 %v45, %v222
    %v225 = vadd.f32 %v46, %v223
    %v226 = vld [vmem:[%s5] sm:$0x1]
    %v228 = vperm.slane %v226, 0
    %v230 = vmul.f32 %v224, %v228
    %v231 = vmul.f32 %v225, %v228
    %v232 = vld [vmem:[%s6] sm:$0x1]
    %v234 = vperm.slane %v232, 0
    %v236 = vadd.f32 %v230, %v234
    %v237 = vadd.f32 %v231, %v234
    %v238 = vmul.f32 %v236, %v38
    %v239 = vmul.f32 %v237, %v43
    %v240 = vpack.c.bf16 %v239, %v238
    %s241 = scalar_lea.vmem %s3, 128
    %v242 = vld [vmem:[%s241] sm:$0xff]
    %v243 = vld [vmem:[%s241 + $0x8] sm:$0xff]
    %v244 = vld [vmem:[%s241 + $0x10] sm:$0xff]
    %v245 = vld [vmem:[%s241 + $0x18] sm:$0xff]
    %v246 = vld [vmem:[%s241 + $0x20] sm:$0xff]
    %v247 = vld [vmem:[%s241 + $0x28] sm:$0xff]
    %v248 = vld [vmem:[%s241 + $0x30] sm:$0xff]
    %v249 = vld [vmem:[%s241 + $0x38] sm:$0xff]
    %v250 = vld [vmem:[%s241 + $0x40] sm:$0xff]
    %v251 = vld [vmem:[%s241 + $0x48] sm:$0xff]
    %v252 = vld [vmem:[%s241 + $0x50] sm:$0xff]
    %v253 = vld [vmem:[%s241 + $0x58] sm:$0xff]
    %v254 = vld [vmem:[%s241 + $0x60] sm:$0xff]
    %v255 = vld [vmem:[%s241 + $0x68] sm:$0xff]
    %v256 = vld [vmem:[%s241 + $0x70] sm:$0xff]
    %v257 = vld [vmem:[%s241 + $0x78] sm:$0xff]
    %s258 = scalar_lea.vmem %s4, 2
    %v259 = vld [vmem:[%s258] sm:$0x3]
    %v261 = vperm.slane %v259, 0
    %v262 = vperm.slane %v259, 1
    %v281 = vunpack.c.l.b16 %v242
    %v282 = vunpack.c.h.b16 %v242
    %v283 = vunpack.c.l.b16 %v243
    %v284 = vunpack.c.h.b16 %v243
    %v285 = vunpack.c.l.b16 %v244
    %v286 = vunpack.c.h.b16 %v244
    %v287 = vunpack.c.l.b16 %v245
    %v288 = vunpack.c.h.b16 %v245
    %v289 = vunpack.c.l.b16 %v246
    %v290 = vunpack.c.h.b16 %v246
    %v291 = vunpack.c.l.b16 %v247
    %v292 = vunpack.c.h.b16 %v247
    %v293 = vunpack.c.l.b16 %v248
    %v294 = vunpack.c.h.b16 %v248
    %v295 = vunpack.c.l.b16 %v249
    %v296 = vunpack.c.h.b16 %v249
    %v297 = vunpack.c.l.b16 %v250
    %v298 = vunpack.c.h.b16 %v250
    %v299 = vunpack.c.l.b16 %v251
    %v300 = vunpack.c.h.b16 %v251
    %v301 = vunpack.c.l.b16 %v252
    %v302 = vunpack.c.h.b16 %v252
    %v303 = vunpack.c.l.b16 %v253
    %v304 = vunpack.c.h.b16 %v253
    %v305 = vunpack.c.l.b16 %v254
    %v306 = vunpack.c.h.b16 %v254
    %v307 = vunpack.c.l.b16 %v255
    %v308 = vunpack.c.h.b16 %v255
    %v309 = vunpack.c.l.b16 %v256
    %v310 = vunpack.c.h.b16 %v256
    %v311 = vunpack.c.l.b16 %v257
    %v312 = vunpack.c.h.b16 %v257
    %v313 = vpack.c.b16 %v283, %v281
    %v314 = vpack.c.b16 %v284, %v282
    %v315 = vpack.c.b16 %v287, %v285
    %v316 = vpack.c.b16 %v288, %v286
    %v317 = vpack.c.b16 %v291, %v289
    %v318 = vpack.c.b16 %v292, %v290
    %v319 = vpack.c.b16 %v295, %v293
    %v320 = vpack.c.b16 %v296, %v294
    %v321 = vpack.c.b16 %v299, %v297
    %v322 = vpack.c.b16 %v300, %v298
    %v323 = vpack.c.b16 %v303, %v301
    %v324 = vpack.c.b16 %v304, %v302
    %v325 = vpack.c.b16 %v307, %v305
    %v326 = vpack.c.b16 %v308, %v306
    %v327 = vpack.c.b16 %v311, %v309
    %v328 = vpack.c.b16 %v312, %v310
    %345 = vmatpush.bf16.msra.mxu0 %v327
    %346 = vmatpush.bf16.msra.mxu0 %v325
    %347 = vmatpush.bf16.msra.mxu0 %v323
    %348 = vmatpush.bf16.msra.mxu0 %v321
    %349 = vmatpush.bf16.msra.mxu0 %v319
    %350 = vmatpush.bf16.msra.mxu0 %v317
    %351 = vmatpush.bf16.msra.mxu0 %v315
    %352 = vmatpush.bf16.msra.mxu0 %v313
    %353 = vmatmul.bf16.gmra.mxu0 %v240
    %v354 = vpop.f32.mrf.mxu0
    %v355 = vadd.f32 %v261, %v354
    %v356 = vpop.f32.mrf.mxu0
    %v357 = vadd.f32 %v261, %v356
    %358 = vdwg.mxu0
    %359 = vmatpush.bf16.msra.mxu0 %v328
    %360 = vmatpush.bf16.msra.mxu0 %v326
    %361 = vmatpush.bf16.msra.mxu0 %v324
    %362 = vmatpush.bf16.msra.mxu0 %v322
    %363 = vmatpush.bf16.msra.mxu0 %v320
    %364 = vmatpush.bf16.msra.mxu0 %v318
    %365 = vmatpush.bf16.msra.mxu0 %v316
    %366 = vmatpush.bf16.msra.mxu0 %v314
    %367 = vmatmul.bf16.gmra.mxu0 %v240
    %v368 = vpop.f32.mrf.mxu0
    %v369 = vadd.f32 %v262, %v368
    %v370 = vpop.f32.mrf.mxu0
    %v371 = vadd.f32 %v262, %v370
    %372 = vdwg.mxu0
    %v373 = vpack.c.bf16 %v369, %v369
    %v375 = vsel %vm183, %v373, 0
    %377 = vmatpush.bf16.msra.mxu0 0
    %378 = vmatpush.bf16.msra.mxu0 0
    %379 = vmatpush.bf16.msra.mxu0 0
    %380 = vmatpush.bf16.msra.mxu0 0
    %381 = vmatpush.bf16.msra.mxu0 0
    %382 = vmatpush.bf16.msra.mxu0 0
    %383 = vmatpush.bf16.msra.mxu0 0
    %384 = vmatpush.bf16.msra.mxu0 %v375
    %385 = vmatmul.bf16.gmra.mxu0 %v181
    %v386 = vpop.f32.mrf.mxu0
    %v387 = vadd.f32 0.0, %v386
    %v388 = vpop.f32.mrf.mxu0
    %389 = vdwg.mxu0
    %v390 = vpack.c.bf16 %v371, %v371
    %v392 = vsel %vm183, %v390, 0
    %394 = vmatpush.bf16.msra.mxu0 0
    %395 = vmatpush.bf16.msra.mxu0 0
    %396 = vmatpush.bf16.msra.mxu0 0
    %397 = vmatpush.bf16.msra.mxu0 0
    %398 = vmatpush.bf16.msra.mxu0 0
    %399 = vmatpush.bf16.msra.mxu0 0
    %400 = vmatpush.bf16.msra.mxu0 0
    %401 = vmatpush.bf16.msra.mxu0 %v392
    %402 = vmatmul.bf16.gmra.mxu0 %v202
    %v403 = vpop.f32.mrf.mxu0
    %v404 = vadd.f32 0.0, %v403
    %v405 = vpop.f32.mrf.mxu0
    %406 = vdwg.mxu0
    %v407 = vadd.f32 %v355, %v387
    %v408 = vadd.f32 %v357, %v404
    %v409 = vmax.f32 %v407, 0.0
    %v410 = vmax.f32 %v408, 0.0
    %v411 = vadd.f32 %v238, %v409
    %v412 = vadd.f32 %v239, %v410
    %s413 = scalar_lea.vmem %s5, 1
    %v414 = vld [vmem:[%s413] sm:$0x1]
    %v416 = vperm.slane %v414, 0
    %v418 = vmul.f32 %v411, %v416
    %v419 = vmul.f32 %v412, %v416
    %s420 = scalar_lea.vmem %s6, 1
    %v421 = vld [vmem:[%s420] sm:$0x1]
    %v423 = vperm.slane %v421, 0
    %v425 = vadd.f32 %v418, %v423
    %v426 = vadd.f32 %v419, %v423
    %v427 = vmul.f32 %v425, %v38
    %v428 = vmul.f32 %v426, %v43
    %v429 = vpack.c.bf16 %v428, %v427
    %s430 = scalar_lea.vmem %s3, 256
    %v431 = vld [vmem:[%s430] sm:$0xff]
    %v432 = vld [vmem:[%s430 + $0x8] sm:$0xff]
    %v433 = vld [vmem:[%s430 + $0x10] sm:$0xff]
    %v434 = vld [vmem:[%s430 + $0x18] sm:$0xff]
    %v435 = vld [vmem:[%s430 + $0x20] sm:$0xff]
    %v436 = vld [vmem:[%s430 + $0x28] sm:$0xff]
    %v437 = vld [vmem:[%s430 + $0x30] sm:$0xff]
    %v438 = vld [vmem:[%s430 + $0x38] sm:$0xff]
    %v439 = vld [vmem:[%s430 + $0x40] sm:$0xff]
    %v440 = vld [vmem:[%s430 + $0x48] sm:$0xff]
    %v441 = vld [vmem:[%s430 + $0x50] sm:$0xff]
    %v442 = vld [vmem:[%s430 + $0x58] sm:$0xff]
    %v443 = vld [vmem:[%s430 + $0x60] sm:$0xff]
    %v444 = vld [vmem:[%s430 + $0x68] sm:$0xff]
    %v445 = vld [vmem:[%s430 + $0x70] sm:$0xff]
    %v446 = vld [vmem:[%s430 + $0x78] sm:$0xff]
    %s447 = scalar_lea.vmem %s4, 4
    %v448 = vld [vmem:[%s447] sm:$0x3]
    %v450 = vperm.slane %v448, 0
    %v451 = vperm.slane %v448, 1
    %v470 = vunpack.c.l.b16 %v431
    %v471 = vunpack.c.h.b16 %v431
    %v472 = vunpack.c.l.b16 %v432
    %v473 = vunpack.c.h.b16 %v432
    %v474 = vunpack.c.l.b16 %v433
    %v475 = vunpack.c.h.b16 %v433
    %v476 = vunpack.c.l.b16 %v434
    %v477 = vunpack.c.h.b16 %v434
    %v478 = vunpack.c.l.b16 %v435
    %v479 = vunpack.c.h.b16 %v435
    %v480 = vunpack.c.l.b16 %v436
    %v481 = vunpack.c.h.b16 %v436
    %v482 = vunpack.c.l.b16 %v437
    %v483 = vunpack.c.h.b16 %v437
    %v484 = vunpack.c.l.b16 %v438
    %v485 = vunpack.c.h.b16 %v438
    %v486 = vunpack.c.l.b16 %v439
    %v487 = vunpack.c.h.b16 %v439
    %v488 = vunpack.c.l.b16 %v440
    %v489 = vunpack.c.h.b16 %v440
    %v490 = vunpack.c.l.b16 %v441
    %v491 = vunpack.c.h.b16 %v441
    %v492 = vunpack.c.l.b16 %v442
    %v493 = vunpack.c.h.b16 %v442
    %v494 = vunpack.c.l.b16 %v443
    %v495 = vunpack.c.h.b16 %v443
    %v496 = vunpack.c.l.b16 %v444
    %v497 = vunpack.c.h.b16 %v444
    %v498 = vunpack.c.l.b16 %v445
    %v499 = vunpack.c.h.b16 %v445
    %v500 = vunpack.c.l.b16 %v446
    %v501 = vunpack.c.h.b16 %v446
    %v502 = vpack.c.b16 %v472, %v470
    %v503 = vpack.c.b16 %v473, %v471
    %v504 = vpack.c.b16 %v476, %v474
    %v505 = vpack.c.b16 %v477, %v475
    %v506 = vpack.c.b16 %v480, %v478
    %v507 = vpack.c.b16 %v481, %v479
    %v508 = vpack.c.b16 %v484, %v482
    %v509 = vpack.c.b16 %v485, %v483
    %v510 = vpack.c.b16 %v488, %v486
    %v511 = vpack.c.b16 %v489, %v487
    %v512 = vpack.c.b16 %v492, %v490
    %v513 = vpack.c.b16 %v493, %v491
    %v514 = vpack.c.b16 %v496, %v494
    %v515 = vpack.c.b16 %v497, %v495
    %v516 = vpack.c.b16 %v500, %v498
    %v517 = vpack.c.b16 %v501, %v499
    %534 = vmatpush.bf16.msra.mxu0 %v516
    %535 = vmatpush.bf16.msra.mxu0 %v514
    %536 = vmatpush.bf16.msra.mxu0 %v512
    %537 = vmatpush.bf16.msra.mxu0 %v510
    %538 = vmatpush.bf16.msra.mxu0 %v508
    %539 = vmatpush.bf16.msra.mxu0 %v506
    %540 = vmatpush.bf16.msra.mxu0 %v504
    %541 = vmatpush.bf16.msra.mxu0 %v502
    %542 = vmatmul.bf16.gmra.mxu0 %v429
    %v543 = vpop.f32.mrf.mxu0
    %v544 = vadd.f32 %v450, %v543
    %v545 = vpop.f32.mrf.mxu0
    %v546 = vadd.f32 %v450, %v545
    %547 = vdwg.mxu0
    %548 = vmatpush.bf16.msra.mxu0 %v517
    %549 = vmatpush.bf16.msra.mxu0 %v515
    %550 = vmatpush.bf16.msra.mxu0 %v513
    %551 = vmatpush.bf16.msra.mxu0 %v511
    %552 = vmatpush.bf16.msra.mxu0 %v509
    %553 = vmatpush.bf16.msra.mxu0 %v507
    %554 = vmatpush.bf16.msra.mxu0 %v505
    %555 = vmatpush.bf16.msra.mxu0 %v503
    %556 = vmatmul.bf16.gmra.mxu0 %v429
    %v557 = vpop.f32.mrf.mxu0
    %v558 = vadd.f32 %v451, %v557
    %v559 = vpop.f32.mrf.mxu0
    %v560 = vadd.f32 %v451, %v559
    %561 = vdwg.mxu0
    %v562 = vpack.c.bf16 %v558, %v558
    %v564 = vsel %vm183, %v562, 0
    %566 = vmatpush.bf16.msra.mxu0 0
    %567 = vmatpush.bf16.msra.mxu0 0
    %568 = vmatpush.bf16.msra.mxu0 0
    %569 = vmatpush.bf16.msra.mxu0 0
    %570 = vmatpush.bf16.msra.mxu0 0
    %571 = vmatpush.bf16.msra.mxu0 0
    %572 = vmatpush.bf16.msra.mxu0 0
    %573 = vmatpush.bf16.msra.mxu0 %v564
    %574 = vmatmul.bf16.gmra.mxu0 %v181
    %v575 = vpop.f32.mrf.mxu0
    %v576 = vadd.f32 0.0, %v575
    %v577 = vpop.f32.mrf.mxu0
    %578 = vdwg.mxu0
    %v579 = vpack.c.bf16 %v560, %v560
    %v581 = vsel %vm183, %v579, 0
    %583 = vmatpush.bf16.msra.mxu0 0
    %584 = vmatpush.bf16.msra.mxu0 0
    %585 = vmatpush.bf16.msra.mxu0 0
    %586 = vmatpush.bf16.msra.mxu0 0
    %587 = vmatpush.bf16.msra.mxu0 0
    %588 = vmatpush.bf16.msra.mxu0 0
    %589 = vmatpush.bf16.msra.mxu0 0
    %590 = vmatpush.bf16.msra.mxu0 %v581
    %591 = vmatmul.bf16.gmra.mxu0 %v202
    %v592 = vpop.f32.mrf.mxu0
    %v593 = vadd.f32 0.0, %v592
    %v594 = vpop.f32.mrf.mxu0
    %595 = vdwg.mxu0
    %v596 = vadd.f32 %v544, %v576
    %v597 = vadd.f32 %v546, %v593
    %v598 = vmax.f32 %v596, 0.0
    %v599 = vmax.f32 %v597, 0.0
    %v600 = vadd.f32 %v427, %v598
    %v601 = vadd.f32 %v428, %v599
    %s602 = scalar_lea.vmem %s5, 2
    %v603 = vld [vmem:[%s602] sm:$0x1]
    %v605 = vperm.slane %v603, 0
    %v607 = vmul.f32 %v600, %v605
    %v608 = vmul.f32 %v601, %v605
    %s609 = scalar_lea.vmem %s6, 2
    %v610 = vld [vmem:[%s609] sm:$0x1]
    %v612 = vperm.slane %v610, 0
    %v614 = vadd.f32 %v607, %v612
    %v615 = vadd.f32 %v608, %v612
    %616 = vst [vmem:[#allocation2] sm:$0xff] %v614
    %617 = vst [vmem:[#allocation2 + $0x8] sm:$0xff] %v615
    // Predicated region
    $region30: #{graph_conv_net_encoder.1} parent=1 // pred_check
      _
    $region31: #{graph_conv_net_encoder.1} parent=1 // pred_check_branch
      %619 = sbr.rel (0) target = $region33
    $region32: #{graph_conv_net_encoder.1} parent=1 // pred_region
      %621 = vsyncadd [#allocation3], 0
      %s622 = sshll.u32 [#allocation2], 4
      %s623 = int_to_ptr.vmem [resolvable:$true] %s622
      %s624 = sshll.u32 %s7, 4
      %s625 = int_to_ptr.hbm [resolvable:$true] %s624
      %630 = dma.vmem_to_hbm [thread:$0]  %s623, 256, %s625, [#allocation3], 128, 128, 8
    $region33: #{graph_conv_net_encoder.1} parent=1 // pred_fallthru
      _
    // Predicated region
    $region34: #{graph_conv_net_encoder.1} parent=1 // pred_check
      _
    $region35: #{graph_conv_net_encoder.1} parent=1 // pred_check_branch
      %632 = sbr.rel (0) target = $region37
    $region36: #{graph_conv_net_encoder.1} parent=1 // pred_region
      %634 = dma.done [#allocation3], 256
    $region37: #{graph_conv_net_encoder.1} parent=1 // pred_fallthru
      _
    %635 = vsyncpa [#allocation3], 1

</llo_original>
